<compile_context>
chip_gen: v5e
topology: v5e:2x2
jax: 0.10.0
libtpu: 0.0.40
codegen_flags: <defaults>
</compile_context>

<pallas_src>
import functools

import jax
import jax.numpy as jnp
from jax.experimental import pallas as pl
from jax.experimental.pallas import tpu as pltpu


def _cab_kernel(x_ref, w1_ref, w2_ref, o_ref, acc_ref, *, inv_len):
    """Grid: (B tiles, L tiles); axis 1 (L) is the reduction axis.

    x_ref:   (B_t, C, L_t)  input tile, native dtype
    w1_ref:  (C, Cr)        fc1 weight, pre-transposed (contraction on C)
    w2_ref:  (Cr, Cout)     fc2 weight, pre-transposed (contraction on Cr)
    o_ref:   (B_t, Cout)    channel-attention gate for this batch tile
    acc_ref: (B_t, C) f32   running sum over L (pool accumulator)
    """
    k = pl.program_id(1)

    @pl.when(k == 0)
    def _():
        acc_ref[...] = jnp.zeros_like(acc_ref)

    # Partial sum over this L tile, accumulated in f32 (XLU lane reduce;
    # cheap relative to the HBM stream of x).
    acc_ref[...] += jnp.sum(x_ref[...], axis=-1, dtype=jnp.float32)

    @pl.when(k == pl.num_programs(1) - 1)
    def _():
        pool = acc_ref[...] * inv_len                              # (B_t, C) mean over L
        # fc1 -> ReLU -> fc2 on the MXU, all in f32.
        h = jnp.dot(pool, w1_ref[...].astype(jnp.float32),
                    preferred_element_type=jnp.float32)            # (B_t, Cr)
        h = jnp.maximum(h, 0.0)
        out = jnp.dot(h, w2_ref[...].astype(jnp.float32),
                      preferred_element_type=jnp.float32)          # (B_t, Cout)
        # Reference: fc_path(avg_pool) + fc_path(max_pool); both pools are
        # AdaptiveAvgPool1d(1) => identical => 2 * fc_path(pool).
        o_ref[...] = jax.nn.sigmoid(2.0 * out).astype(o_ref.dtype)


def _pick_b_tile(b):
    # Output block's second-to-last dim must be divisible by 8 or equal B.
    if b <= 8 or b % 8 != 0:
        return b
    for cand in (64, 32, 16, 8):
        if cand <= b and b % cand == 0:
            return cand
    return b


def _pick_l_tile(length, c, b_tile, itemsize, budget_bytes=8 * 1024 * 1024):
    # Largest L tile (multiple of 128 that divides L) whose input block fits
    # in ~8 MiB (=> <=16 MiB double-buffered, safe even on v7x's 64 MiB VMEM).
    if b_tile * c * length * itemsize <= budget_bytes:
        return length
    best = None
    t = 128
    while t <= length:
        if length % t == 0 and b_tile * c * t * itemsize <= budget_bytes:
            best = t
        t += 128
    return best if best is not None else length


def cab_forward(x, w1, w2):
    """x: (B, C, L); w1: (Cr, C, 1); w2: (Cout, Cr, 1) (nn.Conv1d weight shapes).
    Returns (B, Cout, 1), matching PyTorch CAB.forward."""
    B, C, L = x.shape
    Cr = w1.shape[0]
    Cout = w2.shape[0]
    w1m = jnp.transpose(w1[:, :, 0])         # (C, Cr)   contraction dim first
    w2m = jnp.transpose(w2[:, :, 0])         # (Cr, Cout)

    itemsize = jnp.dtype(x.dtype).itemsize
    b_tile = _pick_b_tile(B)
    l_tile = _pick_l_tile(L, C, b_tile, itemsize)
    grid = (B // b_tile, L // l_tile)

    kernel = functools.partial(_cab_kernel, inv_len=1.0 / float(L))

    flops = B * C * L + 2 * B * C * Cr + 2 * B * Cr * Cout + 3 * B * Cout
    bytes_accessed = (x.size * itemsize
                      + w1m.size * jnp.dtype(w1m.dtype).itemsize
                      + w2m.size * jnp.dtype(w2m.dtype).itemsize
                      + B * Cout * itemsize)

    gate = pl.pallas_call(
        kernel,
        out_shape=jax.ShapeDtypeStruct((B, Cout), x.dtype),
        grid_spec=pltpu.PrefetchScalarGridSpec(
            num_scalar_prefetch=0,
            grid=grid,
            in_specs=[
                pl.BlockSpec((b_tile, C, l_tile), lambda b, k: (b, 0, k)),
                pl.BlockSpec((C, Cr), lambda b, k: (0, 0)),
                pl.BlockSpec((Cr, Cout), lambda b, k: (0, 0)),
            ],
            out_specs=pl.BlockSpec((b_tile, Cout), lambda b, k: (b, 0)),
            scratch_shapes=[pltpu.VMEM((b_tile, C), jnp.float32)],
        ),
        compiler_params=pltpu.CompilerParams(
            dimension_semantics=("parallel", "arbitrary"),
            vmem_limit_bytes=32 * 1024 * 1024,
        ),
        cost_estimate=pl.CostEstimate(
            flops=flops,
            transcendentals=B * Cout,
            bytes_accessed=bytes_accessed,
        ),
    )(x, w1m, w2m)
    return gate[:, :, None]                  # (B, Cout, 1)


def cab_reference(x, w1, w2):
    """Pure-JAX reference mirroring the PyTorch forward exactly."""
    pool = jnp.mean(x, axis=-1, keepdims=True)           # both pools are avg
    w1m = w1[:, :, 0]
    w2m = w2[:, :, 0]

    def fc_path(p):
        h = jnp.einsum("rc,bcl->brl", w1m, p)
        h = jnp.maximum(h, 0.0)
        return jnp.einsum("or,brl->bol", w2m, h)

    out = fc_path(pool) + fc_path(pool)
    return jax.nn.sigmoid(out)


if __name__ == "__main__":
    # Small shapes consistent with the module: B=2, in_channels=4, L=16.
    B, C, L = 2, 4, 16
    ratio = 16
    if C < ratio:
        ratio = C
    Cr = C // ratio          # reduced_channels
    Cout = C                 # out_channels defaults to in_channels

    key = jax.random.PRNGKey(0)
    kx, k1, k2 = jax.random.split(key, 3)
    x = jax.random.normal(kx, (B, C, L), dtype=jnp.float32)
    # init_weights('normal'): Conv weights ~ N(0, 0.02), no bias (bias=False).
    w1 = 0.02 * jax.random.normal(k1, (Cr, C, 1), dtype=jnp.float32)
    w2 = 0.02 * jax.random.normal(k2, (Cout, Cr, 1), dtype=jnp.float32)

    out = cab_forward(x, w1, w2)
    out = jax.block_until_ready(out)

    ref = cab_reference(x, w1, w2)
    assert out.shape == (B, Cout, 1), out.shape
    assert jnp.allclose(out, ref, atol=1e-5, rtol=1e-5), (
        float(jnp.max(jnp.abs(out - ref)))
    )
    print("KERNEL_OK")
</pallas_src>

<mosaic_0001>
module attributes {stable_mosaic.version = 11 : i64} {
  func.func @_cab_kernel(%arg0: i32, %arg1: i32, %arg2: memref<2x4x16xf32, #tpu.memory_space<vmem>>, %arg3: memref<4x1xf32, #tpu.memory_space<vmem>>, %arg4: memref<1x4xf32, #tpu.memory_space<vmem>>, %arg5: memref<2x4xf32, #tpu.memory_space<vmem>>, %arg6: memref<2x4xf32, #tpu.memory_space<vmem>>) attributes {dimension_semantics = [#tpu.dimension_semantics<parallel>, #tpu.dimension_semantics<arbitrary>], iteration_bounds = array<i64: 1, 1>, scalar_prefetch = 0 : i64, scratch_operands = 1 : i64, tpu.core_type = #tpu.core_type<tc>, window_params = [{transform_indices = @transform_0, window_bounds = array<i64: 2, 4, 16>}, {pipeline_mode = #tpu.pipeline_mode<synchronous>, transform_indices = @transform_1, window_bounds = array<i64: 4, 1>}, {pipeline_mode = #tpu.pipeline_mode<synchronous>, transform_indices = @transform_2, window_bounds = array<i64: 1, 4>}, {transform_indices = @transform_3, window_bounds = array<i64: 2, 4>}]} {
    %c0_i32 = arith.constant 0 : i32
    %0 = arith.cmpi eq, %arg1, %c0_i32 : i32
    %1 = arith.extui %0 : i1 to i32
    %c0_i32_0 = arith.constant 0 : i32
    %2 = arith.cmpi ne, %1, %c0_i32_0 : i32
    scf.if %2 {
      %cst_9 = arith.constant 0.000000e+00 : f32
      %11 = vector.broadcast %cst_9 : f32 to vector<2x4xf32>
      %c0_10 = arith.constant 0 : index
      %c0_11 = arith.constant 0 : index
      %12 = vector.load %arg6[%c0_10, %c0_11] : memref<2x4xf32, #tpu.memory_space<vmem>>, vector<2x4xf32>
      tpu.vector_store %arg6[%c0_10, %c0_11], %11 {strides = array<i32>} : memref<2x4xf32, #tpu.memory_space<vmem>>, vector<2x4xf32>,
    } else {
    }
    %c0 = arith.constant 0 : index
    %c0_1 = arith.constant 0 : index
    %3 = vector.load %arg6[%c0, %c0_1] : memref<2x4xf32, #tpu.memory_space<vmem>>, vector<2x4xf32>
    %c0_2 = arith.constant 0 : index
    %c0_3 = arith.constant 0 : index
    %c0_4 = arith.constant 0 : index
    %4 = vector.load %arg2[%c0_2, %c0_3, %c0_4] : memref<2x4x16xf32, #tpu.memory_space<vmem>>, vector<2x4x16xf32>
    %cst = arith.constant dense<0.000000e+00> : vector<2x4xf32>
    %5 = vector.multi_reduction <add>, %4, %cst [2] : vector<2x4x16xf32> to vector<2x4xf32>
    %6 = arith.addf %3, %5 : vector<2x4xf32>
    %c0_5 = arith.constant 0 : index
    %c0_6 = arith.constant 0 : index
    %7 = vector.load %arg6[%c0_5, %c0_6] : memref<2x4xf32, #tpu.memory_space<vmem>>, vector<2x4xf32>
    tpu.vector_store %arg6[%c0_5, %c0_6], %6 {strides = array<i32>} : memref<2x4xf32, #tpu.memory_space<vmem>>, vector<2x4xf32>,
    %c0_i32_7 = arith.constant 0 : i32
    %8 = arith.cmpi eq, %arg1, %c0_i32_7 : i32
    %9 = arith.extui %8 : i1 to i32
    %c0_i32_8 = arith.constant 0 : i32
    %10 = arith.cmpi ne, %9, %c0_i32_8 : i32
    scf.if %10 {
      %c0_9 = arith.constant 0 : index
      %c0_10 = arith.constant 0 : index
      %11 = vector.load %arg6[%c0_9, %c0_10] : memref<2x4xf32, #tpu.memory_space<vmem>>, vector<2x4xf32>
      %cst_11 = arith.constant 6.250000e-02 : f32
      %12 = vector.broadcast %cst_11 : f32 to vector<2x4xf32>
      %13 = arith.mulf %11, %12 : vector<2x4xf32>
      %c0_12 = arith.constant 0 : index
      %c0_13 = arith.constant 0 : index
      %14 = vector.load %arg3[%c0_12, %c0_13] : memref<4x1xf32, #tpu.memory_space<vmem>>, vector<4x1xf32>
      %cst_14 = arith.constant dense<0.000000e+00> : vector<2x1xf32>
      %15 = tpu.matmul %13, %14, %cst_14 {dimension_numbers = #tpu.dot_dimension_numbers<[1], [0], [0], [1], [0, 0, 1, 1], [], []>} : vector<2x4xf32>, vector<4x1xf32>, vector<2x1xf32> -> vector<2x1xf32>
      %cst_15 = arith.constant 0.000000e+00 : f32
      %16 = vector.broadcast %cst_15 : f32 to vector<2x1xf32>
      %17 = arith.maximumf %15, %16 : vector<2x1xf32>
      %c0_16 = arith.constant 0 : index
      %c0_17 = arith.constant 0 : index
      %18 = vector.load %arg4[%c0_16, %c0_17] : memref<1x4xf32, #tpu.memory_space<vmem>>, vector<1x4xf32>
      %cst_18 = arith.constant dense<0.000000e+00> : vector<2x4xf32>
      %19 = tpu.matmul %17, %18, %cst_18 {dimension_numbers = #tpu.dot_dimension_numbers<[1], [0], [0], [1], [0, 0, 1, 1], [], []>} : vector<2x1xf32>, vector<1x4xf32>, vector<2x4xf32> -> vector<2x4xf32>
      %cst_19 = arith.constant 2.000000e+00 : f32
      %20 = vector.broadcast %cst_19 : f32 to vector<2x4xf32>
      %21 = arith.mulf %20, %19 : vector<2x4xf32>
      %22 = arith.negf %21 : vector<2x4xf32>
      %23 = math.exp %22 : vector<2x4xf32>
      %cst_20 = arith.constant 1.000000e+00 : f32
      %24 = vector.broadcast %cst_20 : f32 to vector<2x4xf32>
      %25 = arith.addf %24, %23 : vector<2x4xf32>
      %26 = arith.divf %24, %25 : vector<2x4xf32>
      %c0_21 = arith.constant 0 : index
      %c0_22 = arith.constant 0 : index
      %27 = vector.load %arg5[%c0_21, %c0_22] : memref<2x4xf32, #tpu.memory_space<vmem>>, vector<2x4xf32>
      tpu.vector_store %arg5[%c0_21, %c0_22], %26 {strides = array<i32>} : memref<2x4xf32, #tpu.memory_space<vmem>>, vector<2x4xf32>,
    } else {
    }
    return
  }
  func.func @transform_0(%arg0: i32, %arg1: i32) -> (i32, i32, i32) {
    %c0_i32 = arith.constant 0 : i32
    %c0_i32_0 = arith.constant 0 : i32
    return %arg0, %c0_i32, %arg1 : i32, i32, i32
  }
  func.func @transform_1(%arg0: i32, %arg1: i32) -> (i32, i32) {
    %c0_i32 = arith.constant 0 : i32
    %c0_i32_0 = arith.constant 0 : i32
    %c0_i32_1 = arith.constant 0 : i32
    return %c0_i32, %c0_i32_0 : i32, i32
  }
  func.func @transform_2(%arg0: i32, %arg1: i32) -> (i32, i32) {
    %c0_i32 = arith.constant 0 : i32
    %c0_i32_0 = arith.constant 0 : i32
    %c0_i32_1 = arith.constant 0 : i32
    return %c0_i32, %c0_i32_0 : i32, i32
  }
  func.func @transform_3(%arg0: i32, %arg1: i32) -> (i32, i32) {
    %c0_i32 = arith.constant 0 : i32
    %c0_i32_0 = arith.constant 0 : i32
    return %arg0, %c0_i32 : i32, i32
  }
}

</mosaic_0001>

<llo_original>
// kernel: tpu_custom_call.1
$region0: #{tpu_custom_call.1}
  #allocation0 [shape = 'u32[]', space=smem, size = 0x4, offset = 0x4, fixed_abs, tag = 'smem constant byte address 0x4 - core index']
  #allocation1 [shape = 'u32[72,128]{1,0:T(1,128)}', space=vmem, size = 0x9000, scoped, tag = 'internal scratch']
  #allocation2 [shape = 'f32[2,4]{1,0:T(2,128)}', space=vmem, size = 0x400, scoped, tag = 'scratch operand']
  %s0 = inlined_call_operand.hbm [shape: f32[2,4,16], index: 0, kind: input, shape index: {}]
  %s1 = inlined_call_operand.vmem [shape: f32[4,1], index: 1, kind: input, shape index: {}]
  %s2 = inlined_call_operand.vmem [shape: f32[1,4], index: 2, kind: input, shape index: {}]
  %s3 = inlined_call_operand.hbm [shape: f32[2,4], index: 3, kind: output, shape index: {}]
  %s4 = sld [smem:[#allocation0]]
  $region34: #{tpu_custom_call.1} parent=0
    _
  %s6 = ssub.s32 1, %s4
  %s7 = scalar_select 0, %s6, %s4
  $region1: #{tpu_custom_call.1} parent=0
    #allocation3 [shape = 'u8[4096]{0}', space=vmem, size = 0x1000, scoped, tag = 'input window, operand 0, single buffered']
    #allocation4 [shape = 's32[1]{0}', space=sflag, size = 0x4, scoped, tag = 'scoped memory for tpu_custom_call.1']
    #allocation5 [shape = 's32[1]{0}', space=sflag, size = 0x4, scoped, tag = 'scoped memory for tpu_custom_call.1']
    #allocation6 [shape = 'u8[1024]{0}', space=vmem, size = 0x400, scoped, tag = 'output window, operand 0, single buffered']
    %8 = vsyncpa [#allocation4], 0
    %9 = vsyncpa [#allocation5], 0
    // Predicated region
    $region2: #{tpu_custom_call.1} parent=1 // pred_check
      _
    $region3: #{tpu_custom_call.1} parent=1 // pred_check_branch
      %11 = sbr.rel (0) target = $region5
    $region4: #{tpu_custom_call.1} parent=1 // pred_region
      %13 = vsyncadd [#allocation4], 0
      %s14 = sshll.u32 %s0, 4
      %s15 = int_to_ptr.hbm [resolvable:$true] %s14
      %s16 = sshll.u32 [#allocation3], 4
      %s17 = int_to_ptr.vmem [resolvable:$true] %s16
      %22 = dma.hbm_to_vmem [thread:$0]  %s15, 128, %s17, [#allocation4], 64, 64, 4
    $region5: #{tpu_custom_call.1} parent=1 // pred_fallthru
      _
    // Predicated region
    $region6: #{tpu_custom_call.1} parent=1 // pred_check
      _
    $region7: #{tpu_custom_call.1} parent=1 // pred_check_branch
      %24 = sbr.rel (0) target = $region9
    $region8: #{tpu_custom_call.1} parent=1 // pred_region
      _
    $region9: #{tpu_custom_call.1} parent=1 // pred_fallthru
      _
    // Predicated region
    $region10: #{tpu_custom_call.1} parent=1 // pred_check
      _
    $region11: #{tpu_custom_call.1} parent=1 // pred_check_branch
      %26 = sbr.rel (0) target = $region13
    $region12: #{tpu_custom_call.1} parent=1 // pred_region
      _
    $region13: #{tpu_custom_call.1} parent=1 // pred_fallthru
      _
    // Predicated region
    $region14: #{tpu_custom_call.1} parent=1 // pred_check
      _
    $region15: #{tpu_custom_call.1} parent=1 // pred_check_branch
      %28 = sbr.rel (0) target = $region17
    $region16: #{tpu_custom_call.1} parent=1 // pred_region
      %30 = dma.done [#allocation4], 128
    $region17: #{tpu_custom_call.1} parent=1 // pred_fallthru
      _
    %p31 = scmp.eq.s32.totalorder 0, 0
    // Predicated region
    $region18: #{tpu_custom_call.1} parent=1 // pred_check
      %p32 = pneg %p31
    $region19: #{tpu_custom_call.1} parent=1 // pred_check_branch
      %34 = sbr.rel (%p32) target = $region21
    $region20: #{tpu_custom_call.1} parent=1 // pred_region
      %vm35 = vcmask 25600
      %36 = vst.msk [vmem:[#allocation2] sm:$0x3] %vm35, 0.0
    $region21: #{tpu_custom_call.1} parent=1 // pred_fallthru
      _
    %v37 = vld [vmem:[#allocation2] sm:$0x3]
    %v38 = vld [vmem:[#allocation3] sm:$0xf]
    %v39 = vld [vmem:[#allocation3 + $0x4] sm:$0xf]
    %vm40 = vcmask 125952
    %v41 = vsel %vm40, %v38, 0.0
    %42 = vadd.xlane.f32.xlu0 %v41
    %v43 = vpop.xlane.xlu0 %42
    %v44 = vsel %vm40, %v39, 0.0
    %45 = vadd.xlane.f32.xlu0 %v44
    %v46 = vpop.xlane.xlu0 %45
    %v49 = vlaneseq
    %v50 = vand.u32 %v49, 127
    %v51 = vperm.slane %v43, %v50
    %v52 = vperm.slane %v46, %v50
    %vm53 = vcmask 1041409
    %v54 = vsel %vm53, %v52, %v51
    %v56 = vadd.f32 %v37, %v54
    %vm57 = vcmask 25600
    %58 = vst.msk [vmem:[#allocation2] sm:$0x3] %vm57, %v56
    // Predicated region
    $region22: #{tpu_custom_call.1} parent=1 // pred_check
      %p59 = pneg %p31
    $region23: #{tpu_custom_call.1} parent=1 // pred_check_branch
      %61 = sbr.rel (%p59) target = $region25
    $region24: #{tpu_custom_call.1} parent=1 // pred_region
      %v62 = vld [vmem:[#allocation2] sm:$0x3]
      %v63 = vmul.f32 %v62, 0.0625
      %v64 = vld [vmem:[%s1] sm:$0xf]
      %vm65 = vcmask 31744
      %v67 = vsel %vm65, %v63, 0
      %vm69 = vcmask 1043456
      %v71 = vsel %vm69, %v64, 0
      %73 = vmatpush.msra.mxu0 0.0
      %74 = vmatpush.msra.mxu0 0.0
      %75 = vmatpush.msra.mxu0 0.0
      %76 = vmatpush.msra.mxu0 0.0
      %77 = vmatpush.msra.mxu0 0.0
      %78 = vmatpush.msra.mxu0 0.0
      %79 = vmatpush.msra.mxu0 0.0
      %80 = vmatpush.msra.mxu0 0.0
      %81 = vmatpush.msra.mxu0 0.0
      %82 = vmatpush.msra.mxu0 0.0
      %83 = vmatpush.msra.mxu0 0.0
      %84 = vmatpush.msra.mxu0 0.0
      %85 = vmatpush.msra.mxu0 0.0
      %86 = vmatpush.msra.mxu0 0.0
      %87 = vmatpush.msra.mxu0 0.0
      %88 = vmatpush.msra.mxu0 %v71
      %89 = vmatmul.f32.gmra.mxu0 %v67
      %v90 = vpop.f32.mrf.mxu0
      %v91 = vadd.f32 0.0, %v90
      %92 = vdwg.mxu0
      %v93 = vmax.f32 %v91, 0.0
      %v94 = vld [vmem:[%s2] sm:$0x1]
      %vm95 = vcmask 7168
      %v97 = vsel %vm95, %v93, 0
      %vm99 = vcmask 1040384
      %v101 = vsel %vm99, %v94, 0
      %103 = vmatpush.msra.mxu0 0.0
      %104 = vmatpush.msra.mxu0 0.0
      %105 = vmatpush.msra.mxu0 0.0
      %106 = vmatpush.msra.mxu0 0.0
      %107 = vmatpush.msra.mxu0 0.0
      %108 = vmatpush.msra.mxu0 0.0
      %109 = vmatpush.msra.mxu0 0.0
      %110 = vmatpush.msra.mxu0 0.0
      %111 = vmatpush.msra.mxu0 0.0
      %112 = vmatpush.msra.mxu0 0.0
      %113 = vmatpush.msra.mxu0 0.0
      %114 = vmatpush.msra.mxu0 0.0
      %115 = vmatpush.msra.mxu0 0.0
      %116 = vmatpush.msra.mxu0 0.0
      %117 = vmatpush.msra.mxu0 0.0
      %118 = vmatpush.msra.mxu0 %v101
      %119 = vmatmul.f32.gmra.mxu0 %v97
      %v120 = vpop.f32.mrf.mxu0
      %v121 = vadd.f32 0.0, %v120
      %122 = vdwg.mxu0
      %v123 = vmul.f32 %v121, 2.0
      %v124 = vxor.u32 %v123, 2147483648
      %v125 = vmul.f32 %v124, 1.442695
      %v126 = vpow.pop %v125
      %v127 = vadd.f32 %v126, 1.0
      %v128 = vrcp.pop %v127
      %v129 = vmul.f32 %v127, %v128
      %v130 = vsub.f32 1.0, %v129
      %v131 = vmul.f32 %v128, %v130
      %v132 = vadd.f32 %v128, %v131
      %vm133 = vweird.f32 %v127
      %vm134 = vweird.f32 %v128
      %vm135 = vmor %vm133, %vm134
      %v136 = vsel %vm135, %v128, %v132
      %v137 = vand.u32 2147483647, %v127
      %vm138 = vcmp.eq.f32.partialorder %v137, 8.507059e+37
      %v139 = vand.u32 %v127, 2147483648
      %v140 = vor.u32 1.1754944e-38, %v139
      %v141 = vsel %vm138, %v140, %v136
      %v142 = vmul.f32 1.0, %v141
      %143 = vst.msk [vmem:[#allocation6] sm:$0x3] %vm57, %v142
    $region25: #{tpu_custom_call.1} parent=1 // pred_fallthru
      _
    // Predicated region
    $region26: #{tpu_custom_call.1} parent=1 // pred_check
      _
    $region27: #{tpu_custom_call.1} parent=1 // pred_check_branch
      %145 = sbr.rel (0) target = $region29
    $region28: #{tpu_custom_call.1} parent=1 // pred_region
      %147 = vsyncadd [#allocation5], 0
      %s149 = sshll.u32 [#allocation6], 4
      %s150 = int_to_ptr.vmem [resolvable:$true] %s149
      %s151 = sshll.u32 %s3, 4
      %s152 = int_to_ptr.hbm [resolvable:$true] %s151
      %154 = dma.vmem_to_hbm [thread:$0]  %s150, 32, %s152, [#allocation5]
    $region29: #{tpu_custom_call.1} parent=1 // pred_fallthru
      _
    // Predicated region
    $region30: #{tpu_custom_call.1} parent=1 // pred_check
      _
    $region31: #{tpu_custom_call.1} parent=1 // pred_check_branch
      %156 = sbr.rel (0) target = $region33
    $region32: #{tpu_custom_call.1} parent=1 // pred_region
      %158 = dma.done [#allocation5], 32
    $region33: #{tpu_custom_call.1} parent=1 // pred_fallthru
      _
    %159 = vsyncpa [#allocation4], 1
    %160 = vsyncpa [#allocation5], 1

</llo_original>
